<compile_context>
chip_gen: v6e
topology: v6e:2x2x1
jax: 0.10.0
libtpu: 0.0.40
codegen_flags: <defaults>
</compile_context>

<pallas_src>
import functools
import math

import jax
import jax.numpy as jnp
from jax.experimental import pallas as pl
from jax.experimental.pallas import tpu as pltpu


_NUM_CORES = 2        # v7x has 2 TensorCores/chip; harmless (serial) on v5e/v6e.
_LANES = 1024         # lane-dense last dim (multiple of 128).
_MAX_TILE_ROWS = 512  # (512, 1024) f32 tile = 2 MiB per buffer.
_MIN_TILE_ROWS = 16   # sublane-safe tile height for f32 and bf16.


def _round_up(a, b):
    return ((a + b - 1) // b) * b


def _loss_vae_kernel(x_ref, d_ref, mu_ref, sig_ref, out_ref, acc_ref, *,
                     use_l2, loss_lambda, include_kld, latent_size):
    c = pl.program_id(0)             # core-split axis ("parallel")
    i = pl.program_id(1)             # streaming reduction axis ("arbitrary")
    num_cores = pl.num_programs(0)
    num_tiles = pl.num_programs(1)

    @pl.when(i == 0)
    def _init():
        acc_ref[...] = jnp.zeros_like(acc_ref)

    # Widen (possibly bf16) inputs in-kernel; accumulate in f32 (required for
    # v5e which has no bf16 VPU path, and protects the large sum numerically).
    x = x_ref[...].astype(jnp.float32)
    d = d_ref[...].astype(jnp.float32)
    diff = x - d
    if use_l2:
        acc_ref[...] += diff * diff       # nn.MSELoss(reduction='sum')
    else:
        acc_ref[...] += jnp.abs(diff)     # nn.L1Loss(reduction='sum')

    @pl.when(i == num_tiles - 1)
    def _finalize():
        partial = jnp.sum(acc_ref[...])   # single cross-lane reduce per core
        if include_kld:
            mu = mu_ref[...].astype(jnp.float32)
            sig = sig_ref[...].astype(jnp.float32)
            # -0.5 * sum(1 - mu^2 + sigma - exp(sigma)); constant "1" term
            # folded into the scalar latent_size.
            kld = -0.5 * (jnp.float32(latent_size)
                          - jnp.sum(mu * mu)
                          + jnp.sum(sig)
                          - jnp.sum(jnp.exp(sig)))
            # Only the last core adds the (tiny) KLD contribution so the
            # wrapper-side sum of per-core partials is exact.
            partial = partial + jnp.where(c == num_cores - 1,
                                          jnp.float32(loss_lambda) * kld,
                                          jnp.float32(0.0))
        out_ref[...] = jnp.zeros_like(out_ref) + partial


def loss_vae(reconstructed_sample, data, mu, sigma, *,
             l1_or_l2_loss="l2", loss_lambda=1.0, include_kld_loss=True):
    """Pallas implementation of LossVAE.forward (sum_kld_loss=True)."""
    if l1_or_l2_loss not in ("l1", "l2"):
        raise ValueError("Please select l1_or_l2_loss out of 'l1' or 'l2'")
    if reconstructed_sample.shape != data.shape:
        raise ValueError("reconstructed_sample and data must have equal shapes")

    n = math.prod(reconstructed_sample.shape)
    rows = -(-n // _LANES)                                   # cdiv
    tile_rows = min(_MAX_TILE_ROWS, _round_up(rows, _MIN_TILE_ROWS))
    rows_padded = _round_up(rows, _NUM_CORES * tile_rows)
    tiles_per_core = rows_padded // (_NUM_CORES * tile_rows)
    n_padded = rows_padded * _LANES

    def _to_lane_dense(a):
        flat = a.reshape(-1)
        if n_padded != n:
            flat = jnp.pad(flat, (0, n_padded - n))          # zeros -> 0 loss
        return flat.reshape(rows_padded, _LANES)

    x2 = _to_lane_dense(reconstructed_sample)
    d2 = _to_lane_dense(data)
    mu2 = mu.reshape(1, -1)
    sig2 = sigma.reshape(1, -1)

    kernel = functools.partial(
        _loss_vae_kernel,
        use_l2=(l1_or_l2_loss == "l2"),
        loss_lambda=float(loss_lambda),
        include_kld=bool(include_kld_loss),
        latent_size=int(mu2.shape[1]),
    )

    def big_index_map(c, i):
        return (c * tiles_per_core + i, 0)

    # Deeper buffering only pays off when there are enough steps to pipeline.
    big_kwargs = {}
    if tiles_per_core >= 3:
        big_kwargs["pipeline_mode"] = pl.Buffered(3)
    big_spec = pl.BlockSpec((tile_rows, _LANES), big_index_map, **big_kwargs)

    out = pl.pallas_call(
        kernel,
        out_shape=jax.ShapeDtypeStruct((_NUM_CORES * 8, 128), jnp.float32),
        grid=(_NUM_CORES, tiles_per_core),
        in_specs=[
            big_spec,                                         # reconstructed
            big_spec,                                         # data
            pl.BlockSpec(mu2.shape, lambda c, i: (0, 0)),     # mu (DMA'd once)
            pl.BlockSpec(sig2.shape, lambda c, i: (0, 0)),    # sigma (log-var)
        ],
        out_specs=pl.BlockSpec((8, 128), lambda c, i: (c, 0)),
        scratch_shapes=[pltpu.VMEM((tile_rows, _LANES), jnp.float32)],
        compiler_params=pltpu.CompilerParams(
            dimension_semantics=("parallel", "arbitrary"),
            vmem_limit_bytes=32 * 1024 * 1024,
        ),
    )(x2, d2, mu2, sig2)

    # Each core's (8,128) block holds its broadcast partial; add the partials.
    # TODO(synk): PyTorch returns the nn.MSELoss *module* (a bug) when
    # include_kld_loss is False; we return the reconstruction loss value.
    # TODO(synk): the sum_kld_loss=False (per-element KLD vector) path and the
    # module's stateful bookkeeping/printing are not implemented.
    return jnp.sum(out[0::8, 0])


def _loss_vae_ref(reconstructed_sample, data, mu, sigma, *,
                  l1_or_l2_loss="l2", loss_lambda=1.0, include_kld_loss=True):
    """Pure-JAX reference mirroring the PyTorch forward."""
    diff = (reconstructed_sample.astype(jnp.float32)
            - data.astype(jnp.float32))
    if l1_or_l2_loss == "l2":
        recon = jnp.sum(diff * diff)
    else:
        recon = jnp.sum(jnp.abs(diff))
    mu = mu.astype(jnp.float32)
    sigma = sigma.astype(jnp.float32)
    kld = -0.5 * jnp.sum(1.0 - jnp.square(mu) + sigma - jnp.exp(sigma))
    if include_kld_loss:
        return recon + loss_lambda * kld
    return recon


if __name__ == "__main__":
    key = jax.random.PRNGKey(0)
    k1, k2, k3, k4, k5, k6, k7, k8 = jax.random.split(key, 8)

    # --- Test 1: small shapes consistent with the module (single-tile path) ---
    B, C, H, W = 2, 4, 16, 16
    LAT = 32
    reconstructed = jax.random.normal(k1, (B, C, H, W), dtype=jnp.float32)
    data = jax.random.normal(k2, (B, C, H, W), dtype=jnp.float32)
    mu = 0.5 * jax.random.normal(k3, (B, LAT), dtype=jnp.float32)
    sigma = 0.5 * jax.random.normal(k4, (B, LAT), dtype=jnp.float32)
    loss_lambda = 0.1

    for which in ("l2", "l1"):
        out = jax.block_until_ready(
            loss_vae(reconstructed, data, mu, sigma,
                     l1_or_l2_loss=which, loss_lambda=loss_lambda,
                     include_kld_loss=True))
        ref = _loss_vae_ref(reconstructed, data, mu, sigma,
                            l1_or_l2_loss=which, loss_lambda=loss_lambda,
                            include_kld_loss=True)
        assert jnp.allclose(out, ref, rtol=1e-5, atol=1e-4), (which, out, ref)

    # --- Test 2: larger bf16 batch exercising the tiled multi-step pipeline,
    #     Buffered(3) depth and the 2-way core split / accumulator path. -------
    B2, C2, H2, W2 = 16, 4, 256, 256
    rec2 = jax.random.normal(k5, (B2, C2, H2, W2), dtype=jnp.bfloat16)
    dat2 = jax.random.normal(k6, (B2, C2, H2, W2), dtype=jnp.bfloat16)
    mu2 = 0.5 * jax.random.normal(k7, (B2, LAT), dtype=jnp.float32)
    sig2 = 0.5 * jax.random.normal(k8, (B2, LAT), dtype=jnp.float32)

    out2 = jax.block_until_ready(
        loss_vae(rec2, dat2, mu2, sig2,
                 l1_or_l2_loss="l2", loss_lambda=loss_lambda,
                 include_kld_loss=True))
    ref2 = _loss_vae_ref(rec2, dat2, mu2, sig2,
                         l1_or_l2_loss="l2", loss_lambda=loss_lambda,
                         include_kld_loss=True)
    assert jnp.allclose(out2, ref2, rtol=1e-3, atol=1e-2), (out2, ref2)

    print("KERNEL_OK")
</pallas_src>

<mosaic_0001>
module attributes {stable_mosaic.version = 11 : i64} {
  func.func @_loss_vae_kernel(%arg0: i32, %arg1: i32, %arg2: memref<16x1024xf32, #tpu.memory_space<vmem>>, %arg3: memref<16x1024xf32, #tpu.memory_space<vmem>>, %arg4: memref<1x64xf32, #tpu.memory_space<vmem>>, %arg5: memref<1x64xf32, #tpu.memory_space<vmem>>, %arg6: memref<8x128xf32, #tpu.memory_space<vmem>>, %arg7: memref<16x1024xf32, #tpu.memory_space<vmem>>) attributes {dimension_semantics = [#tpu.dimension_semantics<parallel>, #tpu.dimension_semantics<arbitrary>], iteration_bounds = array<i64: 2, 1>, scalar_prefetch = 0 : i64, scratch_operands = 1 : i64, tpu.core_type = #tpu.core_type<tc>, window_params = [{transform_indices = @transform_0, window_bounds = array<i64: 16, 1024>}, {transform_indices = @transform_1, window_bounds = array<i64: 16, 1024>}, {pipeline_mode = #tpu.pipeline_mode<synchronous>, transform_indices = @transform_2, window_bounds = array<i64: 1, 64>}, {pipeline_mode = #tpu.pipeline_mode<synchronous>, transform_indices = @transform_3, window_bounds = array<i64: 1, 64>}, {transform_indices = @transform_4, window_bounds = array<i64: 8, 128>}]} {
    %c0_i32 = arith.constant 0 : i32
    %0 = arith.cmpi eq, %arg1, %c0_i32 : i32
    %1 = arith.extui %0 : i1 to i32
    %c0_i32_0 = arith.constant 0 : i32
    %2 = arith.cmpi ne, %1, %c0_i32_0 : i32
    scf.if %2 {
      %cst = arith.constant 0.000000e+00 : f32
      %13 = vector.broadcast %cst : f32 to vector<16x1024xf32>
      %c0_10 = arith.constant 0 : index
      %c0_11 = arith.constant 0 : index
      %14 = vector.load %arg7[%c0_10, %c0_11] : memref<16x1024xf32, #tpu.memory_space<vmem>>, vector<16x1024xf32>
      tpu.vector_store %arg7[%c0_10, %c0_11], %13 {strides = array<i32>} : memref<16x1024xf32, #tpu.memory_space<vmem>>, vector<16x1024xf32>,
    } else {
    }
    %c0 = arith.constant 0 : index
    %c0_1 = arith.constant 0 : index
    %3 = vector.load %arg2[%c0, %c0_1] : memref<16x1024xf32, #tpu.memory_space<vmem>>, vector<16x1024xf32>
    %c0_2 = arith.constant 0 : index
    %c0_3 = arith.constant 0 : index
    %4 = vector.load %arg3[%c0_2, %c0_3] : memref<16x1024xf32, #tpu.memory_space<vmem>>, vector<16x1024xf32>
    %5 = arith.subf %3, %4 : vector<16x1024xf32>
    %c0_4 = arith.constant 0 : index
    %c0_5 = arith.constant 0 : index
    %6 = vector.load %arg7[%c0_4, %c0_5] : memref<16x1024xf32, #tpu.memory_space<vmem>>, vector<16x1024xf32>
    %7 = arith.mulf %5, %5 : vector<16x1024xf32>
    %8 = arith.addf %6, %7 : vector<16x1024xf32>
    %c0_6 = arith.constant 0 : index
    %c0_7 = arith.constant 0 : index
    %9 = vector.load %arg7[%c0_6, %c0_7] : memref<16x1024xf32, #tpu.memory_space<vmem>>, vector<16x1024xf32>
    tpu.vector_store %arg7[%c0_6, %c0_7], %8 {strides = array<i32>} : memref<16x1024xf32, #tpu.memory_space<vmem>>, vector<16x1024xf32>,
    %c0_i32_8 = arith.constant 0 : i32
    %10 = arith.cmpi eq, %arg1, %c0_i32_8 : i32
    %11 = arith.extui %10 : i1 to i32
    %c0_i32_9 = arith.constant 0 : i32
    %12 = arith.cmpi ne, %11, %c0_i32_9 : i32
    scf.if %12 {
      %c0_10 = arith.constant 0 : index
      %c0_11 = arith.constant 0 : index
      %13 = vector.load %arg7[%c0_10, %c0_11] : memref<16x1024xf32, #tpu.memory_space<vmem>>, vector<16x1024xf32>
      %14 = vector.shape_cast %13 : vector<16x1024xf32> to vector<1x16x1024xf32>
      %cst = arith.constant dense<0.000000e+00> : vector<1xf32>
      %15 = vector.multi_reduction <add>, %14, %cst [1, 2] : vector<1x16x1024xf32> to vector<1xf32>
      %16 = vector.shape_cast %15 : vector<1xf32> to vector<1x1x1xf32>
      %17 = vector.extract %16[0, 0, 0] : f32 from vector<1x1x1xf32>
      %c0_12 = arith.constant 0 : index
      %c0_13 = arith.constant 0 : index
      %18 = vector.load %arg4[%c0_12, %c0_13] : memref<1x64xf32, #tpu.memory_space<vmem>>, vector<1x64xf32>
      %c0_14 = arith.constant 0 : index
      %c0_15 = arith.constant 0 : index
      %19 = vector.load %arg5[%c0_14, %c0_15] : memref<1x64xf32, #tpu.memory_space<vmem>>, vector<1x64xf32>
      %20 = arith.mulf %18, %18 : vector<1x64xf32>
      %21 = vector.shape_cast %20 : vector<1x64xf32> to vector<1x1x64xf32>
      %cst_16 = arith.constant dense<0.000000e+00> : vector<1xf32>
      %22 = vector.multi_reduction <add>, %21, %cst_16 [1, 2] : vector<1x1x64xf32> to vector<1xf32>
      %23 = vector.shape_cast %22 : vector<1xf32> to vector<1x1x1xf32>
      %24 = vector.extract %23[0, 0, 0] : f32 from vector<1x1x1xf32>
      %cst_17 = arith.constant 6.400000e+01 : f32
      %25 = arith.subf %cst_17, %24 : f32
      %26 = vector.shape_cast %19 : vector<1x64xf32> to vector<1x1x64xf32>
      %cst_18 = arith.constant dense<0.000000e+00> : vector<1xf32>
      %27 = vector.multi_reduction <add>, %26, %cst_18 [1, 2] : vector<1x1x64xf32> to vector<1xf32>
      %28 = vector.shape_cast %27 : vector<1xf32> to vector<1x1x1xf32>
      %29 = vector.extract %28[0, 0, 0] : f32 from vector<1x1x1xf32>
      %30 = arith.addf %25, %29 : f32
      %31 = math.exp %19 : vector<1x64xf32>
      %32 = vector.shape_cast %31 : vector<1x64xf32> to vector<1x1x64xf32>
      %cst_19 = arith.constant dense<0.000000e+00> : vector<1xf32>
      %33 = vector.multi_reduction <add>, %32, %cst_19 [1, 2] : vector<1x1x64xf32> to vector<1xf32>
      %34 = vector.shape_cast %33 : vector<1xf32> to vector<1x1x1xf32>
      %35 = vector.extract %34[0, 0, 0] : f32 from vector<1x1x1xf32>
      %36 = arith.subf %30, %35 : f32
      %cst_20 = arith.constant -5.000000e-01 : f32
      %37 = arith.mulf %cst_20, %36 : f32
      %c1_i32 = arith.constant 1 : i32
      %38 = arith.cmpi eq, %arg0, %c1_i32 : i32
      %cst_21 = arith.constant 1.000000e-01 : f32
      %39 = arith.mulf %cst_21, %37 : f32
      %cst_22 = arith.constant 0.000000e+00 : f32
      %40 = arith.select %38, %39, %cst_22 : f32
      %41 = arith.addf %17, %40 : f32
      %cst_23 = arith.constant 0.000000e+00 : f32
      %42 = vector.broadcast %cst_23 : f32 to vector<8x128xf32>
      %43 = vector.broadcast %41 : f32 to vector<8x128xf32>
      %44 = arith.addf %42, %43 : vector<8x128xf32>
      %c0_24 = arith.constant 0 : index
      %c0_25 = arith.constant 0 : index
      %45 = vector.load %arg6[%c0_24, %c0_25] : memref<8x128xf32, #tpu.memory_space<vmem>>, vector<8x128xf32>
      tpu.vector_store %arg6[%c0_24, %c0_25], %44 {strides = array<i32>} : memref<8x128xf32, #tpu.memory_space<vmem>>, vector<8x128xf32>,
    } else {
    }
    return
  }
  func.func @transform_0(%arg0: i32, %arg1: i32) -> (i32, i32) {
    %c1_i32 = arith.constant 1 : i32
    %0 = arith.muli %arg0, %c1_i32 : i32
    %1 = arith.addi %0, %arg1 : i32
    %c0_i32 = arith.constant 0 : i32
    %c0_i32_0 = arith.constant 0 : i32
    return %1, %c0_i32 : i32, i32
  }
  func.func @transform_1(%arg0: i32, %arg1: i32) -> (i32, i32) {
    %c1_i32 = arith.constant 1 : i32
    %0 = arith.muli %arg0, %c1_i32 : i32
    %1 = arith.addi %0, %arg1 : i32
    %c0_i32 = arith.constant 0 : i32
    %c0_i32_0 = arith.constant 0 : i32
    return %1, %c0_i32 : i32, i32
  }
  func.func @transform_2(%arg0: i32, %arg1: i32) -> (i32, i32) {
    %c0_i32 = arith.constant 0 : i32
    %c0_i32_0 = arith.constant 0 : i32
    %c0_i32_1 = arith.constant 0 : i32
    return %c0_i32, %c0_i32_0 : i32, i32
  }
  func.func @transform_3(%arg0: i32, %arg1: i32) -> (i32, i32) {
    %c0_i32 = arith.constant 0 : i32
    %c0_i32_0 = arith.constant 0 : i32
    %c0_i32_1 = arith.constant 0 : i32
    return %c0_i32, %c0_i32_0 : i32, i32
  }
  func.func @transform_4(%arg0: i32, %arg1: i32) -> (i32, i32) {
    %c0_i32 = arith.constant 0 : i32
    %c0_i32_0 = arith.constant 0 : i32
    return %arg0, %c0_i32 : i32, i32
  }
}

</mosaic_0001>

<llo_original>
// kernel: tpu_custom_call.1
$region0: #{tpu_custom_call.1}
  #allocation0 [shape = 'u32[]', space=smem, size = 0x4, offset = 0x4, fixed_abs, tag = 'smem constant byte address 0x4 - core index']
  #allocation1 [shape = 'u32[144,128]{1,0:T(1,128)}', space=vmem, size = 0x12000, scoped, tag = 'internal scratch']
  #allocation2 [shape = 'f32[16,1024]{1,0:T(8,128)}', space=vmem, size = 0x10000, scoped, tag = 'scratch operand']
  %s0 = inlined_call_operand.hbm [shape: f32[32,1024], index: 0, kind: input, shape index: {}]
  %s1 = inlined_call_operand.hbm [shape: f32[32,1024], index: 1, kind: input, shape index: {}]
  %s2 = inlined_call_operand.vmem [shape: f32[1,64], index: 2, kind: input, shape index: {}]
  %s3 = inlined_call_operand.vmem [shape: f32[1,64], index: 3, kind: input, shape index: {}]
  %s4 = inlined_call_operand.hbm [shape: f32[16,128], index: 4, kind: output, shape index: {}]
  %s5 = sld [smem:[#allocation0]]
  $region65: #{tpu_custom_call.1} parent=0
    _
  %s7 = ssub.s32 1, %s5
  %s8 = scalar_select 0, %s7, %s5
  $region1: #{tpu_custom_call.1} parent=0
    #allocation3 [shape = 'u8[131072]{0}', space=vmem, size = 0x20000, scoped, tag = 'input window, operand 0']
    #allocation4 [shape = 's32[2]{0}', space=sflag, size = 0x8, scoped, tag = 'scoped memory for tpu_custom_call.1']
    #allocation5 [shape = 's32[2]{0}', space=sflag, size = 0x8, scoped, tag = 'scoped memory for tpu_custom_call.1']
    #allocation6 [shape = 'u8[131072]{0}', space=vmem, size = 0x20000, scoped, tag = 'input window, operand 1']
    #allocation7 [shape = 's32[2]{0}', space=sflag, size = 0x8, scoped, tag = 'scoped memory for tpu_custom_call.1']
    #allocation8 [shape = 'u8[8192]{0}', space=vmem, size = 0x2000, scoped, tag = 'output window, operand 0']
    %9 = vsyncpa [#allocation4], 0
    %s10 = scalar_lea.sflag [#allocation4], 1
    %11 = vsyncpa %s10, 0
    %12 = vsyncpa [#allocation7], 0
    %s13 = scalar_lea.sflag [#allocation7], 1
    %14 = vsyncpa %s13, 0
    %15 = vsyncpa [#allocation5], 0
    %s16 = scalar_lea.sflag [#allocation5], 1
    %17 = vsyncpa %s16, 0
    loop: start=0, step=1, limit=4
    $region2: #{tpu_custom_call.1} parent=1 // loop_pre_header
      _
    $region3: #{tpu_custom_call.1} parent=1 // loop_header
      %s19 = sphi 0, %s23
      %p20 = scmp.ge.s32.totalorder %s19, 4
      %s26 = sphi 0, %s38
      %s27 = sphi 0, %s34
      %s28 = sphi 0, %s26
      %s29 = sphi 0, %s27
      %s30 = sphi 0, %s28
      %s31 = sphi 0, %s29
      %s43 = sphi 0, %s45
      %s46 = sphi 0, %s43
      %s47 = sphi 0, %s46
      %s63 = sphi 0, %s47
      %s71 = sphi 0, %s73
      %s74 = sphi 0, %s71
      %s75 = sphi 0, %s74
      %s91 = sphi 0, %s75
      %s95 = sphi 0, %s95
      %s97 = sphi 0, %s95
      %s98 = sphi 0, %s97
      %s112 = sphi 0, %s98
      %s116 = sphi 0, %s116
      %s118 = sphi 0, %s116
      %s119 = sphi 0, %s118
      %s133 = sphi 0, %s119
      %s139 = sphi 0, %s141
      %s142 = sphi 0, %s139
      %s143 = sphi 0, %s142
      %s159 = sphi 0, %s143
    $region4: #{tpu_custom_call.1} parent=1 // loop_header_branch
      %22 = sbr.rel (%p20) target = $region8
    $region5: #{tpu_custom_call.1} parent=1 // loop_body
      %s24 = ssub.s32 %s19, 1
      %s25 = ssub.s32 %s19, 2
      %s32 = sadd.s32 1, %s27
      %p33 = scmp.ge.s32.totalorder %s32, 1
      %s34 = scalar_select %p33, 0, %s32
      %s35 = sadd.s32 1, %s26
      %s36 = scalar_select %p33, %s35, %s26
      %p37 = scmp.ge.s32.totalorder %s36, 2
      %s38 = scalar_select %p37, 0, %s36
      %s39 = sadd.s32 %s26, %s27
      %s40 = sadd.s32 %s38, %s34
      %s41 = ssub.s32 %s39, %s40
      %p42 = scmp.eq.s32.totalorder %s41, 0
      %s44 = sadd.s32 %s43, 1
      %s45 = scalar_select %p42, %s43, %s44
      %p48 = pneg %p42
      %p49 = scmp.eq.s32.totalorder %s19, 1
      %p50 = por %p48, %p49
      %p51 = scmp.ne.s32.totalorder %s43, %s46
      %p52 = scmp.eq.s32.totalorder %s19, 0
      %p53 = por %p51, %p52
      %p54 = scmp.ne.s32.totalorder %s43, %s46
      %p55 = scmp.eq.s32.totalorder %s24, 1
      %p56 = por %p54, %p55
      %p57 = scmp.ne.s32.totalorder %s46, %s47
      %p58 = scmp.eq.s32.totalorder %s24, 0
      %p59 = por %p57, %p58
      %p60 = scmp.ne.s32.totalorder %s46, %s47
      %p61 = scmp.eq.s32.totalorder %s25, 1
      %p62 = por %p60, %p61
      %p64 = scmp.ne.s32.totalorder %s47, %s63
      %p65 = scmp.eq.s32.totalorder %s25, 0
      %p66 = por %p64, %p65
      %s67 = sadd.s32 %s26, %s27
      %s68 = sadd.s32 %s38, %s34
      %s69 = ssub.s32 %s67, %s68
      %p70 = scmp.eq.s32.totalorder %s69, 0
      %s72 = sadd.s32 %s71, 1
      %s73 = scalar_select %p70, %s71, %s72
      %p76 = pneg %p70
      %p77 = scmp.eq.s32.totalorder %s19, 1
      %p78 = por %p76, %p77
      %p79 = scmp.ne.s32.totalorder %s71, %s74
      %p80 = scmp.eq.s32.totalorder %s19, 0
      %p81 = por %p79, %p80
      %p82 = scmp.ne.s32.totalorder %s71, %s74
      %p83 = scmp.eq.s32.totalorder %s24, 1
      %p84 = por %p82, %p83
      %p85 = scmp.ne.s32.totalorder %s74, %s75
      %p86 = scmp.eq.s32.totalorder %s24, 0
      %p87 = por %p85, %p86
      %p88 = scmp.ne.s32.totalorder %s74, %s75
      %p89 = scmp.eq.s32.totalorder %s25, 1
      %p90 = por %p88, %p89
      %p92 = scmp.ne.s32.totalorder %s75, %s91
      %p93 = scmp.eq.s32.totalorder %s25, 0
      %p94 = por %p92, %p93
      %s96 = sadd.s32 %s95, 1
      %p99 = scmp.eq.s32.totalorder %s19, 1
      %p100 = scmp.ne.s32.totalorder %s95, %s97
      %p101 = scmp.eq.s32.totalorder %s19, 0
      %p102 = por %p100, %p101
      %p103 = scmp.ne.s32.totalorder %s95, %s97
      %p104 = scmp.eq.s32.totalorder %s24, 1
      %p105 = por %p103, %p104
      %p106 = scmp.ne.s32.totalorder %s97, %s98
      %p107 = scmp.eq.s32.totalorder %s24, 0
      %p108 = por %p106, %p107
      %p109 = scmp.ne.s32.totalorder %s97, %s98
      %p110 = scmp.eq.s32.totalorder %s25, 1
      %p111 = por %p109, %p110
      %p113 = scmp.ne.s32.totalorder %s98, %s112
      %p114 = scmp.eq.s32.totalorder %s25, 0
      %p115 = por %p113, %p114
      %s117 = sadd.s32 %s116, 1
      %p120 = scmp.eq.s32.totalorder %s19, 1
      %p121 = scmp.ne.s32.totalorder %s116, %s118
      %p122 = scmp.eq.s32.totalorder %s19, 0
      %p123 = por %p121, %p122
      %p124 = scmp.ne.s32.totalorder %s116, %s118
      %p125 = scmp.eq.s32.totalorder %s24, 1
      %p126 = por %p124, %p125
      %p127 = scmp.ne.s32.totalorder %s118, %s119
      %p128 = scmp.eq.s32.totalorder %s24, 0
      %p129 = por %p127, %p128
      %p130 = scmp.ne.s32.totalorder %s118, %s119
      %p131 = scmp.eq.s32.totalorder %s25, 1
      %p132 = por %p130, %p131
      %p134 = scmp.ne.s32.totalorder %s119, %s133
      %p135 = scmp.eq.s32.totalorder %s25, 0
      %p136 = por %p134, %p135
      %s137 = ssub.s32 %s26, %s38
      %p138 = scmp.eq.s32.totalorder %s137, 0
      %s140 = sadd.s32 %s139, 1
      %s141 = scalar_select %p138, %s139, %s140
      %p144 = pneg %p138
      %p145 = scmp.eq.s32.totalorder %s19, 1
      %p146 = por %p144, %p145
      %p147 = scmp.ne.s32.totalorder %s139, %s142
      %p148 = scmp.eq.s32.totalorder %s19, 0
      %p149 = por %p147, %p148
      %p150 = scmp.ne.s32.totalorder %s139, %s142
      %p151 = scmp.eq.s32.totalorder %s24, 1
      %p152 = por %p150, %p151
      %p153 = scmp.ne.s32.totalorder %s142, %s143
      %p154 = scmp.eq.s32.totalorder %s24, 0
      %p155 = por %p153, %p154
      %p156 = scmp.ne.s32.totalorder %s142, %s143
      %p157 = scmp.eq.s32.totalorder %s25, 1
      %p158 = por %p156, %p157
      %p160 = scmp.ne.s32.totalorder %s143, %s159
      %p161 = scmp.eq.s32.totalorder %s25, 0
      %p162 = por %p160, %p161
      %p163 = scmp.le.s32.totalorder 1, %s19
      %p164 = scmp.lt.s32.totalorder %s19, 3
      %p165 = pnand %p163, %p164
      %p166 = pneg %p165
      // Predicated region
      $region9: #{tpu_custom_call.1} parent=5 // pred_check
        _
      $region10: #{tpu_custom_call.1} parent=5 // pred_check_branch
        %168 = sbr.rel (%p165) target = $region12
      $region11: #{tpu_custom_call.1} parent=5 // pred_region
        %s169 = ssub.s32 %s19, 1
        // Predicated region
        $region13: #{tpu_custom_call.1} parent=11 // pred_check
          %p170 = pneg %p108
        $region14: #{tpu_custom_call.1} parent=11 // pred_check_branch
          %172 = sbr.rel (%p170) target = $region16
        $region15: #{tpu_custom_call.1} parent=11 // pred_region
          _
        $region16: #{tpu_custom_call.1} parent=11 // pred_fallthru
          _
        // Predicated region
        $region17: #{tpu_custom_call.1} parent=11 // pred_check
          %p173 = pneg %p129
        $region18: #{tpu_custom_call.1} parent=11 // pred_check_branch
          %175 = sbr.rel (%p173) target = $region20
        $region19: #{tpu_custom_call.1} parent=11 // pred_region
          _
        $region20: #{tpu_custom_call.1} parent=11 // pred_fallthru
          _
      $region12: #{tpu_custom_call.1} parent=5 // pred_fallthru
        _
      %p176 = scmp.lt.s32.totalorder %s19, 2
      // Predicated region
      $region21: #{tpu_custom_call.1} parent=5 // pred_check
        %p177 = pneg %p176
      $region22: #{tpu_custom_call.1} parent=5 // pred_check_branch
        %179 = sbr.rel (%p177) target = $region24
      $region23: #{tpu_custom_call.1} parent=5 // pred_region
        // Predicated region
        $region25: #{tpu_custom_call.1} parent=23 // pred_check
          %p180 = pneg %p53
        $region26: #{tpu_custom_call.1} parent=23 // pred_check_branch
          %182 = sbr.rel (%p180) target = $region28
        $region27: #{tpu_custom_call.1} parent=23 // pred_region
          %s183 = sand.u32 %s43, 1
          %s184 = scalar_lea.sflag [#allocation4], %s183
          %s185 = sand.u32 %s43, 1
          %s186 = smul.addr %s185, 128
          %s187 = scalar_lea.vmem [#allocation3], %s186
          %s188 = sadd.s32 %s26, %s27
          %s189 = smul.u32 2, %s188
          %s191 = ssub.s32 2048, 2048
          %192 = vsyncadd %s184, %s191
          %s193 = smul.addr %s189, 8
          %s194 = smul.addr %s193, 128
          %s195 = scalar_lea.hbm %s0, %s194
          %s196 = sshll.u32 %s187, 4
          %s197 = int_to_ptr.vmem [resolvable:$true] %s196
          %202 = dma.hbm_to_vmem [thread:$0]  %s195, 2048, %s197, %s184, 1024, 1024, 64
        $region28: #{tpu_custom_call.1} parent=23 // pred_fallthru
          _
        // Predicated region
        $region29: #{tpu_custom_call.1} parent=23 // pred_check
          %p203 = pneg %p81
        $region30: #{tpu_custom_call.1} parent=23 // pred_check_branch
          %205 = sbr.rel (%p203) target = $region32
        $region31: #{tpu_custom_call.1} parent=23 // pred_region
          %s206 = sand.u32 %s71, 1
          %s207 = scalar_lea.sflag [#allocation7], %s206
          %s208 = sand.u32 %s71, 1
          %s209 = smul.addr %s208, 128
          %s210 = scalar_lea.vmem [#allocation6], %s209
          %s211 = sadd.s32 %s26, %s27
          %s212 = smul.u32 2, %s211
          %s214 = ssub.s32 2048, 2048
          %215 = vsyncadd %s207, %s214
          %s216 = smul.addr %s212, 8
          %s217 = smul.addr %s216, 128
          %s218 = scalar_lea.hbm %s1, %s217
          %s219 = sshll.u32 %s210, 4
          %s220 = int_to_ptr.vmem [resolvable:$true] %s219
          %225 = dma.hbm_to_vmem [thread:$0]  %s218, 2048, %s220, %s207, 1024, 1024, 64
        $region32: #{tpu_custom_call.1} parent=23 // pred_fallthru
          _
      $region24: #{tpu_custom_call.1} parent=5 // pred_fallthru
        _
      %p226 = scmp.le.s32.totalorder 1, %s19
      %p227 = scmp.lt.s32.totalorder %s19, 3
      %p228 = pnand %p226, %p227
      %p229 = pneg %p228
      // Predicated region
      $region33: #{tpu_custom_call.1} parent=5 // pred_check
        _
      $region34: #{tpu_custom_call.1} parent=5 // pred_check_branch
        %231 = sbr.rel (%p228) target = $region36
      $region35: #{tpu_custom_call.1} parent=5 // pred_region
        %s232 = ssub.s32 %s19, 1
        %s233 = sand.u32 %s46, 1
        %s234 = scalar_lea.sflag [#allocation4], %s233
        %s235 = sand.u32 %s46, 1
        %s236 = smul.addr %s235, 128
        %s237 = scalar_lea.vmem [#allocation3], %s236
        // Predicated region
        $region37: #{tpu_custom_call.1} parent=35 // pred_check
          %p238 = pneg %p59
        $region38: #{tpu_custom_call.1} parent=35 // pred_check_branch
          %240 = sbr.rel (%p238) target = $region40
        $region39: #{tpu_custom_call.1} parent=35 // pred_region
          %241 = dma.done %s234, 2048
        $region40: #{tpu_custom_call.1} parent=35 // pred_fallthru
          _
        %s242 = sand.u32 %s74, 1
        %s243 = scalar_lea.sflag [#allocation7], %s242
        %s244 = sand.u32 %s74, 1
        %s245 = smul.addr %s244, 128
        %s246 = scalar_lea.vmem [#allocation6], %s245
        // Predicated region
        $region41: #{tpu_custom_call.1} parent=35 // pred_check
          %p247 = pneg %p87
        $region42: #{tpu_custom_call.1} parent=35 // pred_check_branch
          %249 = sbr.rel (%p247) target = $region44
        $region43: #{tpu_custom_call.1} parent=35 // pred_region
          %250 = dma.done %s243, 2048
        $region44: #{tpu_custom_call.1} parent=35 // pred_fallthru
          _
        %s251 = sand.u32 %s46, 1
        %s252 = scalar_lea.sflag [#allocation4], %s251
        %s253 = sand.u32 %s46, 1
        %s254 = smul.addr %s253, 128
        %s255 = scalar_lea.vmem [#allocation3], %s254
        %p256 = pneg %p59
        %p257 = pneg %p56
        %s258 = sand.u32 %s74, 1
        %s259 = scalar_lea.sflag [#allocation7], %s258
        %s260 = sand.u32 %s74, 1
        %s261 = smul.addr %s260, 128
        %s262 = scalar_lea.vmem [#allocation6], %s261
        %p263 = pneg %p87
        %p264 = pneg %p84
        %p265 = pneg %p108
        %p266 = pneg %p105
        %p267 = pneg %p129
        %p268 = pneg %p126
        %p269 = pneg %p155
        %p270 = pneg %p152
        %s271 = sand.u32 %s142, 1
        %s272 = scalar_lea.sflag [#allocation5], %s271
        %s273 = sand.u32 %s142, 1
        %s274 = smul.addr %s273, 8
        %s275 = scalar_lea.vmem [#allocation8], %s274
        %s276 = sadd.s32 %s28, %s29
        %s277 = smul.u32 2, %s276
        %s278 = sadd.s32 %s28, %s29
        %s279 = smul.u32 2, %s278
        %p280 = scmp.eq.s32.totalorder %s29, 0
        // Predicated region
        $region45: #{tpu_custom_call.1} parent=35 // pred_check
          %p281 = pneg %p280
        $region46: #{tpu_custom_call.1} parent=35 // pred_check_branch
          %283 = sbr.rel (%p281) target = $region48
        $region47: #{tpu_custom_call.1} parent=35 // pred_region
          %284 = vst [vmem:[#allocation2] sm:$0xff] 0.0
          %285 = vst [vmem:[#allocation2 + $0x8] sm:$0xff] 0.0
          %286 = vst [vmem:[#allocation2 + $0x10] sm:$0xff] 0.0
          %287 = vst [vmem:[#allocation2 + $0x18] sm:$0xff] 0.0
          %288 = vst [vmem:[#allocation2 + $0x20] sm:$0xff] 0.0
          %289 = vst [vmem:[#allocation2 + $0x28] sm:$0xff] 0.0
          %290 = vst [vmem:[#allocation2 + $0x30] sm:$0xff] 0.0
          %291 = vst [vmem:[#allocation2 + $0x38] sm:$0xff] 0.0
          %292 = vst [vmem:[#allocation2 + $0x40] sm:$0xff] 0.0
          %293 = vst [vmem:[#allocation2 + $0x48] sm:$0xff] 0.0
          %294 = vst [vmem:[#allocation2 + $0x50] sm:$0xff] 0.0
          %295 = vst [vmem:[#allocation2 + $0x58] sm:$0xff] 0.0
          %296 = vst [vmem:[#allocation2 + $0x60] sm:$0xff] 0.0
          %297 = vst [vmem:[#allocation2 + $0x68] sm:$0xff] 0.0
          %298 = vst [vmem:[#allocation2 + $0x70] sm:$0xff] 0.0
          %299 = vst [vmem:[#allocation2 + $0x78] sm:$0xff] 0.0
        $region48: #{tpu_custom_call.1} parent=35 // pred_fallthru
          _
        %v300 = vld [vmem:[%s237] sm:$0xff]
        %v301 = vld [vmem:[%s237 + $0x8] sm:$0xff]
        %v302 = vld [vmem:[%s237 + $0x10] sm:$0xff]
        %v303 = vld [vmem:[%s237 + $0x18] sm:$0xff]
        %v304 = vld [vmem:[%s237 + $0x20] sm:$0xff]
        %v305 = vld [vmem:[%s237 + $0x28] sm:$0xff]
        %v306 = vld [vmem:[%s237 + $0x30] sm:$0xff]
        %v307 = vld [vmem:[%s237 + $0x38] sm:$0xff]
        %v308 = vld [vmem:[%s237 + $0x40] sm:$0xff]
        %v309 = vld [vmem:[%s237 + $0x48] sm:$0xff]
        %v310 = vld [vmem:[%s237 + $0x50] sm:$0xff]
        %v311 = vld [vmem:[%s237 + $0x58] sm:$0xff]
        %v312 = vld [vmem:[%s237 + $0x60] sm:$0xff]
        %v313 = vld [vmem:[%s237 + $0x68] sm:$0xff]
        %v314 = vld [vmem:[%s237 + $0x70] sm:$0xff]
        %v315 = vld [vmem:[%s237 + $0x78] sm:$0xff]
        %v316 = vld [vmem:[%s246] sm:$0xff]
        %v317 = vld [vmem:[%s246 + $0x8] sm:$0xff]
        %v318 = vld [vmem:[%s246 + $0x10] sm:$0xff]
        %v319 = vld [vmem:[%s246 + $0x18] sm:$0xff]
        %v320 = vld [vmem:[%s246 + $0x20] sm:$0xff]
        %v321 = vld [vmem:[%s246 + $0x28] sm:$0xff]
        %v322 = vld [vmem:[%s246 + $0x30] sm:$0xff]
        %v323 = vld [vmem:[%s246 + $0x38] sm:$0xff]
        %v324 = vld [vmem:[%s246 + $0x40] sm:$0xff]
        %v325 = vld [vmem:[%s246 + $0x48] sm:$0xff]
        %v326 = vld [vmem:[%s246 + $0x50] sm:$0xff]
        %v327 = vld [vmem:[%s246 + $0x58] sm:$0xff]
        %v328 = vld [vmem:[%s246 + $0x60] sm:$0xff]
        %v329 = vld [vmem:[%s246 + $0x68] sm:$0xff]
        %v330 = vld [vmem:[%s246 + $0x70] sm:$0xff]
        %v331 = vld [vmem:[%s246 + $0x78] sm:$0xff]
        %v332 = vsub.f32 %v300, %v316
        %v333 = vsub.f32 %v301, %v317
        %v334 = vsub.f32 %v302, %v318
        %v335 = vsub.f32 %v303, %v319
        %v336 = vsub.f32 %v304, %v320
        %v337 = vsub.f32 %v305, %v321
        %v338 = vsub.f32 %v306, %v322
        %v339 = vsub.f32 %v307, %v323
        %v340 = vsub.f32 %v308, %v324
        %v341 = vsub.f32 %v309, %v325
        %v342 = vsub.f32 %v310, %v326
        %v343 = vsub.f32 %v311, %v327
        %v344 = vsub.f32 %v312, %v328
        %v345 = vsub.f32 %v313, %v329
        %v346 = vsub.f32 %v314, %v330
        %v347 = vsub.f32 %v315, %v331
        %v348 = vld [vmem:[#allocation2] sm:$0xff]
        %v349 = vld [vmem:[#allocation2 + $0x8] sm:$0xff]
        %v350 = vld [vmem:[#allocation2 + $0x10] sm:$0xff]
        %v351 = vld [vmem:[#allocation2 + $0x18] sm:$0xff]
        %v352 = vld [vmem:[#allocation2 + $0x20] sm:$0xff]
        %v353 = vld [vmem:[#allocation2 + $0x28] sm:$0xff]
        %v354 = vld [vmem:[#allocation2 + $0x30] sm:$0xff]
        %v355 = vld [vmem:[#allocation2 + $0x38] sm:$0xff]
        %v356 = vld [vmem:[#allocation2 + $0x40] sm:$0xff]
        %v357 = vld [vmem:[#allocation2 + $0x48] sm:$0xff]
        %v358 = vld [vmem:[#allocation2 + $0x50] sm:$0xff]
        %v359 = vld [vmem:[#allocation2 + $0x58] sm:$0xff]
        %v360 = vld [vmem:[#allocation2 + $0x60] sm:$0xff]
        %v361 = vld [vmem:[#allocation2 + $0x68] sm:$0xff]
        %v362 = vld [vmem:[#allocation2 + $0x70] sm:$0xff]
        %v363 = vld [vmem:[#allocation2 + $0x78] sm:$0xff]
        %v364 = vmul.f32 %v332, %v332
        %v365 = vmul.f32 %v333, %v333
        %v366 = vmul.f32 %v334, %v334
        %v367 = vmul.f32 %v335, %v335
        %v368 = vmul.f32 %v336, %v336
        %v369 = vmul.f32 %v337, %v337
        %v370 = vmul.f32 %v338, %v338
        %v371 = vmul.f32 %v339, %v339
        %v372 = vmul.f32 %v340, %v340
        %v373 = vmul.f32 %v341, %v341
        %v374 = vmul.f32 %v342, %v342
        %v375 = vmul.f32 %v343, %v343
        %v376 = vmul.f32 %v344, %v344
        %v377 = vmul.f32 %v345, %v345
        %v378 = vmul.f32 %v346, %v346
        %v379 = vmul.f32 %v347, %v347
        %v380 = vadd.f32 %v348, %v364
        %v381 = vadd.f32 %v349, %v365
        %v382 = vadd.f32 %v350, %v366
        %v383 = vadd.f32 %v351, %v367
        %v384 = vadd.f32 %v352, %v368
        %v385 = vadd.f32 %v353, %v369
        %v386 = vadd.f32 %v354, %v370
        %v387 = vadd.f32 %v355, %v371
        %v388 = vadd.f32 %v356, %v372
        %v389 = vadd.f32 %v357, %v373
        %v390 = vadd.f32 %v358, %v374
        %v391 = vadd.f32 %v359, %v375
        %v392 = vadd.f32 %v360, %v376
        %v393 = vadd.f32 %v361, %v377
        %v394 = vadd.f32 %v362, %v378
        %v395 = vadd.f32 %v363, %v379
        %396 = vst [vmem:[#allocation2] sm:$0xff] %v380
        %397 = vst [vmem:[#allocation2 + $0x8] sm:$0xff] %v381
        %398 = vst [vmem:[#allocation2 + $0x10] sm:$0xff] %v382
        %399 = vst [vmem:[#allocation2 + $0x18] sm:$0xff] %v383
        %400 = vst [vmem:[#allocation2 + $0x20] sm:$0xff] %v384
        %401 = vst [vmem:[#allocation2 + $0x28] sm:$0xff] %v385
        %402 = vst [vmem:[#allocation2 + $0x30] sm:$0xff] %v386
        %403 = vst [vmem:[#allocation2 + $0x38] sm:$0xff] %v387
        %404 = vst [vmem:[#allocation2 + $0x40] sm:$0xff] %v388
        %405 = vst [vmem:[#allocation2 + $0x48] sm:$0xff] %v389
        %406 = vst [vmem:[#allocation2 + $0x50] sm:$0xff] %v390
        %407 = vst [vmem:[#allocation2 + $0x58] sm:$0xff] %v391
        %408 = vst [vmem:[#allocation2 + $0x60] sm:$0xff] %v392
        %409 = vst [vmem:[#allocation2 + $0x68] sm:$0xff] %v393
        %410 = vst [vmem:[#allocation2 + $0x70] sm:$0xff] %v394
        %411 = vst [vmem:[#allocation2 + $0x78] sm:$0xff] %v395
        // Predicated region
        $region49: #{tpu_custom_call.1} parent=35 // pred_check
          %p412 = pneg %p280
        $region50: #{tpu_custom_call.1} parent=35 // pred_check_branch
          %414 = sbr.rel (%p412) target = $region52
        $region51: #{tpu_custom_call.1} parent=35 // pred_region
          %v415 = vld [vmem:[#allocation2] sm:$0xff]
          %v416 = vld [vmem:[#allocation2 + $0x8] sm:$0xff]
          %v417 = vld [vmem:[#allocation2 + $0x10] sm:$0xff]
          %v418 = vld [vmem:[#allocation2 + $0x18] sm:$0xff]
          %v419 = vld [vmem:[#allocation2 + $0x20] sm:$0xff]
          %v420 = vld [vmem:[#allocation2 + $0x28] sm:$0xff]
          %v421 = vld [vmem:[#allocation2 + $0x30] sm:$0xff]
          %v422 = vld [vmem:[#allocation2 + $0x38] sm:$0xff]
          %v423 = vld [vmem:[#allocation2 + $0x40] sm:$0xff]
          %v424 = vld [vmem:[#allocation2 + $0x48] sm:$0xff]
          %v425 = vld [vmem:[#allocation2 + $0x50] sm:$0xff]
          %v426 = vld [vmem:[#allocation2 + $0x58] sm:$0xff]
          %v427 = vld [vmem:[#allocation2 + $0x60] sm:$0xff]
          %v428 = vld [vmem:[#allocation2 + $0x68] sm:$0xff]
          %v429 = vld [vmem:[#allocation2 + $0x70] sm:$0xff]
          %v430 = vld [vmem:[#allocation2 + $0x78] sm:$0xff]
          %v431 = vadd.f32 %v415, %v416
          %v432 = vadd.f32 %v431, %v417
          %v433 = vadd.f32 %v432, %v418
          %v434 = vadd.f32 %v433, %v419
          %v435 = vadd.f32 %v434, %v420
          %v436 = vadd.f32 %v435, %v421
          %v437 = vadd.f32 %v436, %v422
          %v438 = vadd.f32 %v437, %v423
          %v439 = vadd.f32 %v438, %v424
          %v440 = vadd.f32 %v439, %v425
          %v441 = vadd.f32 %v440, %v426
          %v442 = vadd.f32 %v441, %v427
          %v443 = vadd.f32 %v442, %v428
          %v444 = vadd.f32 %v443, %v429
          %v445 = vadd.f32 %v444, %v430
          %446 = vadd.xlane.f32.xlu0 %v445
          %v447 = vpop.xlane.xlu0 %446
          %v448 = vrot.slane %v447, 4
          %v449 = vadd.f32 %v447, %v448
          %v450 = vrot.slane %v449, 2
          %v451 = vadd.f32 %v449, %v450
          %v452 = vrot.slane %v451, 1
          %v453 = vadd.f32 %v451, %v452
          %s454 = vtos %v453
          %v455 = vld [vmem:[%s2] sm:$0x1]
          %v456 = vld [vmem:[%s3] sm:$0x1]
          %v457 = vmul.f32 %v455, %v455
          %vm458 = vcmask 516096
          %v459 = vsel %vm458, %v457, 0.0
          %460 = vadd.xlane.f32.xlu0 %v459
          %v461 = vpop.xlane.xlu0 %460
          %v462 = vrot.slane %v461, 4
          %v463 = vadd.f32 %v461, %v462
          %v464 = vrot.slane %v463, 2
          %v465 = vadd.f32 %v463, %v464
          %v466 = vrot.slane %v465, 1
          %v467 = vadd.f32 %v465, %v466
          %s468 = vtos %v467
          %s469 = ssub.f32 64.0, %s468
          %v470 = vsel %vm458, %v456, 0.0
          %471 = vadd.xlane.f32.xlu0 %v470
          %v472 = vpop.xlane.xlu0 %471
          %v473 = vrot.slane %v472, 4
          %v474 = vadd.f32 %v472, %v473
          %v475 = vrot.slane %v474, 2
          %v476 = vadd.f32 %v474, %v475
          %v477 = vrot.slane %v476, 1
          %v478 = vadd.f32 %v476, %v477
          %s479 = vtos %v478
          %s480 = sadd.f32 %s469, %s479
          %v481 = vmul.f32 %v456, 1.442695
          %v482 = vpow.pop %v481
          %v483 = vsel %vm458, %v482, 0.0
          %484 = vadd.xlane.f32.xlu0 %v483
          %v485 = vpop.xlane.xlu0 %484
          %v486 = vrot.slane %v485, 4
          %v487 = vadd.f32 %v485, %v486
          %v488 = vrot.slane %v487, 2
          %v489 = vadd.f32 %v487, %v488
          %v490 = vrot.slane %v489, 1
          %v491 = vadd.f32 %v489, %v490
          %s492 = vtos %v491
          %s493 = ssub.f32 %s480, %s492
          %s494 = smul.f32 %s493, -0.5
          %p495 = scmp.eq.s32.totalorder %s28, 1
          %s496 = smul.f32 %s494, 0.1
          %s497 = scalar_select %p495, %s496, 0.0
          %s498 = sadd.f32 %s454, %s497
          %v499 = vstv %s498
          %v500 = vadd.f32 %v499, 0.0
          %501 = vst [vmem:[%s275] sm:$0xff] %v500
        $region52: #{tpu_custom_call.1} parent=35 // pred_fallthru
          _
        %s502 = sand.u32 %s142, 1
        %s503 = scalar_lea.sflag [#allocation5], %s502
        %s504 = sand.u32 %s142, 1
        %s505 = smul.addr %s504, 8
        %s506 = scalar_lea.vmem [#allocation8], %s505
        // Predicated region
        $region53: #{tpu_custom_call.1} parent=35 // pred_check
          %p507 = pneg %p152
        $region54: #{tpu_custom_call.1} parent=35 // pred_check_branch
          %509 = sbr.rel (%p507) target = $region56
        $region55: #{tpu_custom_call.1} parent=35 // pred_region
          %s511 = ssub.s32 128, 128
          %512 = vsyncadd %s503, %s511
          %s513 = smul.addr %s28, 128
          %s514 = scalar_lea.hbm %s4, %s513
          %s516 = sshll.u32 %s506, 4
          %s517 = int_to_ptr.vmem [resolvable:$true] %s516
          %519 = dma.vmem_to_hbm [thread:$0]  %s517, 128, %s514, %s503
        $region56: #{tpu_custom_call.1} parent=35 // pred_fallthru
          _
      $region36: #{tpu_custom_call.1} parent=5 // pred_fallthru
        _
      %p520 = scmp.le.s32.totalorder 2, %s19
      // Predicated region
      $region57: #{tpu_custom_call.1} parent=5 // pred_check
        %p521 = pneg %p520
      $region58: #{tpu_custom_call.1} parent=5 // pred_check_branch
        %523 = sbr.rel (%p521) target = $region60
      $region59: #{tpu_custom_call.1} parent=5 // pred_region
        %s524 = ssub.s32 %s19, 2
        // Predicated region
        $region61: #{tpu_custom_call.1} parent=59 // pred_check
          %p525 = pneg %p158
        $region62: #{tpu_custom_call.1} parent=59 // pred_check_branch
          %527 = sbr.rel (%p525) target = $region64
        $region63: #{tpu_custom_call.1} parent=59 // pred_region
          %s528 = sand.u32 %s143, 1
          %s529 = scalar_lea.sflag [#allocation5], %s528
          %s530 = sand.u32 %s143, 1
          %s531 = smul.addr %s530, 8
          %s532 = scalar_lea.vmem [#allocation8], %s531
          %533 = dma.done %s529, 128
        $region64: #{tpu_custom_call.1} parent=59 // pred_fallthru
          _
      $region60: #{tpu_custom_call.1} parent=5 // pred_fallthru
        _
    $region6: #{tpu_custom_call.1} parent=1 // loop_footer
      %s23 = sadd.s32 1, %s19
    $region7: #{tpu_custom_call.1} parent=1 // loop_footer_branch
      %18 = sbr.rel target = $region3
    $region8: #{tpu_custom_call.1} parent=1 // loop_exit
      _
    %534 = vsyncpa [#allocation4], 1
    %s535 = scalar_lea.sflag [#allocation4], 1
    %536 = vsyncpa %s535, 1
    %537 = vsyncpa [#allocation7], 1
    %s538 = scalar_lea.sflag [#allocation7], 1
    %539 = vsyncpa %s538, 1
    %540 = vsyncpa [#allocation5], 1
    %s541 = scalar_lea.sflag [#allocation5], 1
    %542 = vsyncpa %s541, 1

</llo_original>
